<compile_context>
chip_gen: v7x
topology: tpu7x:2x2x1
jax: 0.10.0
libtpu: 0.0.40
codegen_flags: <defaults>
</compile_context>

<pallas_src>
import functools
import math

import jax
import jax.numpy as jnp
from jax.experimental import pallas as pl
from jax.experimental.pallas import tpu as pltpu


def _round_up(x, m):
    return ((x + m - 1) // m) * m


def _choose_tile(dim, candidates):
    for c in candidates:
        if dim % c == 0:
            return c
    return None


# ----------------------------------------------------------------------------
# Pallas tiled matmul: bf16 operands, f32 accumulator, fused bias + activation
# ----------------------------------------------------------------------------
def _matmul_kernel(a_ref, b_ref, bias_ref, o_ref, acc_ref, *, act):
    k = pl.program_id(2)

    @pl.when(k == 0)
    def _():
        acc_ref[...] = jnp.zeros_like(acc_ref)

    acc_ref[...] += jnp.dot(a_ref[...], b_ref[...],
                            preferred_element_type=jnp.float32)

    @pl.when(k == pl.num_programs(2) - 1)
    def _():
        out = acc_ref[...] + bias_ref[...]
        if act == "leaky_relu":
            out = jnp.where(out >= 0, out, 0.01 * out)
        elif act == "sigmoid":
            out = 1.0 / (1.0 + jnp.exp(-out))
        o_ref[...] = out.astype(o_ref.dtype)


def matmul_bias(a, b, bias, act="none"):
    """a:(M,K), b:(K,N), bias:(N,) -> (M,N) f32. bf16 MXU operands, f32 acc."""
    M, K = a.shape
    K2, N = b.shape
    assert K == K2

    # --- adaptive tile selection (minimize pure padding waste) -------------
    Mp = _round_up(M, 8)
    if Mp <= 256:
        tm = Mp
    else:
        tm = _choose_tile(Mp, (256, 128, 64, 32, 16, 8)) or 256
        Mp = _round_up(Mp, tm)

    Kp = _round_up(K, 128)
    if Kp <= 512:
        tk = Kp
    else:
        tk = _choose_tile(Kp, (512, 256))
        if tk is None:
            if Kp >= 2048:           # many K-steps: prefer 512 tile + small pad
                Kp = _round_up(Kp, 512)
                tk = 512
            else:
                tk = 128

    Np = _round_up(N, 128)
    if Np <= 512:
        tn = Np
    else:
        tn = _choose_tile(Np, (512, 256, 128)) or 128
        Np = _round_up(Np, tn)

    # Worst-case VMEM: (tm*tk + tk*tn) bf16 * 2 bufs + (tm*tn) f32 * (2 out + acc)
    # ~= 3 MiB at (256, 512, 512) -- well under the 32 MiB scoped default on
    # v5e/v6e/v7x, so no vmem_limit_bytes override is needed.

    a_p = a if (Mp == M and Kp == K) else jnp.pad(a, ((0, Mp - M), (0, Kp - K)))
    b_p = b if (Kp == K and Np == N) else jnp.pad(b, ((0, Kp - K), (0, Np - N)))
    a_p = a_p.astype(jnp.bfloat16)
    b_p = b_p.astype(jnp.bfloat16)
    bias_p = jnp.pad(bias, (0, Np - N)).astype(jnp.float32).reshape(1, Np)

    out = pl.pallas_call(
        functools.partial(_matmul_kernel, act=act),
        out_shape=jax.ShapeDtypeStruct((Mp, Np), jnp.float32),
        grid_spec=pltpu.PrefetchScalarGridSpec(
            num_scalar_prefetch=0,
            grid=(Mp // tm, Np // tn, Kp // tk),
            in_specs=[
                pl.BlockSpec((tm, tk), lambda i, j, k: (i, k)),
                pl.BlockSpec((tk, tn), lambda i, j, k: (k, j)),
                pl.BlockSpec((1, tn), lambda i, j, k: (0, j)),
            ],
            out_specs=pl.BlockSpec((tm, tn), lambda i, j, k: (i, j)),
            scratch_shapes=[pltpu.VMEM((tm, tn), jnp.float32)],
        ),
        compiler_params=pltpu.CompilerParams(
            dimension_semantics=("parallel", "parallel", "arbitrary")),
    )(a_p, b_p, bias_p)
    if Mp == M and Np == N:
        return out
    return out[:M, :N]


# ----------------------------------------------------------------------------
# Conv via im2col + Pallas matmul (K padding folded into the concatenate)
# ----------------------------------------------------------------------------
def conv2d(x, w, b, stride, pad, act="none"):
    """x: (B,H,W,Cin) NHWC; w: PyTorch Conv2d weight (Cout,Cin,kh,kw); b:(Cout,)."""
    Cout, Cin, kh, kw = w.shape
    x = x.astype(jnp.bfloat16)                      # bf16 im2col: half the bytes
    xp = jnp.pad(x, ((0, 0), (pad, pad), (pad, pad), (0, 0)))
    B, H, W, C = xp.shape
    Ho = (H - kh) // stride + 1
    Wo = (W - kw) // stride + 1
    cols = [xp[:, i:i + Ho * stride:stride, j:j + Wo * stride:stride, :]
            for i in range(kh) for j in range(kw)]
    K = kh * kw * C
    kpad = _round_up(K, 128) - K
    if kpad:                                        # fold K padding into concat
        cols.append(jnp.zeros((B, Ho, Wo, kpad), xp.dtype))
    patches = jnp.concatenate(cols, axis=-1).reshape(B * Ho * Wo, K + kpad)
    wm = jnp.transpose(w, (2, 3, 1, 0)).reshape(K, Cout)
    if kpad:
        wm = jnp.pad(wm, ((0, kpad), (0, 0)))
    out = matmul_bias(patches, wm, b, act=act)
    return out.reshape(B, Ho, Wo, Cout)


# Sub-pixel phase decomposition taps for ConvTranspose2d(k=4, s=2, p=1):
#   output parity a=0 (even): uses kernel rows {1,3} at input offsets {0,-1}
#   output parity a=1 (odd) : uses kernel rows {0,2} at input offsets {+1,0}
_CT_TAPS = {0: ((1, 0), (3, -1)), 1: ((0, 1), (2, 0))}


def _conv_transpose_s2_k4_p1(x, w, b, act="none"):
    """ConvTranspose2d(kernel=4, stride=2, pad=1) via 4 phase convs over the
    un-dilated input; outputs interleaved.  w: (Cin,Cout,4,4), x NHWC."""
    Cin, Cout, kh, kw = w.shape
    B, H, W, _ = x.shape
    x = x.astype(jnp.bfloat16)
    xp = jnp.pad(x, ((0, 0), (1, 1), (1, 1), (0, 0)))
    K = 4 * Cin
    kpad = _round_up(K, 128) - K
    phases = []
    for a in (0, 1):
        row = []
        for c in (0, 1):
            cols, wrows = [], []
            for kr, dr in _CT_TAPS[a]:
                for kc, dc in _CT_TAPS[c]:
                    cols.append(xp[:, 1 + dr:1 + dr + H, 1 + dc:1 + dc + W, :])
                    wrows.append(w[:, :, kr, kc])            # (Cin, Cout)
            if kpad:
                cols.append(jnp.zeros((B, H, W, kpad), xp.dtype))
            patches = jnp.concatenate(cols, axis=-1).reshape(B * H * W, K + kpad)
            wm = jnp.concatenate(wrows, axis=0)
            if kpad:
                wm = jnp.pad(wm, ((0, kpad), (0, 0)))
            y = matmul_bias(patches, wm, b, act=act)
            row.append(y.reshape(B, H, W, Cout))
        phases.append(row)
    stacked = jnp.stack([jnp.stack(r, axis=0) for r in phases], axis=0)  # (2,2,B,H,W,C)
    return jnp.transpose(stacked, (2, 3, 0, 4, 1, 5)).reshape(B, 2 * H, 2 * W, Cout)


def conv_transpose2d(x, w, b, stride, pad, act="none"):
    """x NHWC; w: PyTorch ConvTranspose2d weight (Cin,Cout,kh,kw); b:(Cout,)."""
    Cin, Cout, kh, kw = w.shape
    if stride == 1:
        # direct-conv equivalent: W'[co,ci,i,j] = W[ci,co,kh-1-i,kw-1-j]
        w_conv = jnp.transpose(w[:, :, ::-1, ::-1], (1, 0, 2, 3))
        return conv2d(x, w_conv, b, stride=1, pad=kh - 1 - pad, act=act)
    assert stride == 2 and kh == 4 and kw == 4 and pad == 1
    return _conv_transpose_s2_k4_p1(x, w, b, act=act)


# ----------------------------------------------------------------------------
# Elementwise / normalization glue (plain JAX, f32)
# ----------------------------------------------------------------------------
def leaky_relu(x, slope=0.01):
    return jnp.where(x >= 0, x, slope * x)


def batchnorm_train(x, gamma, beta, eps=1e-5):
    # BatchNorm2d training mode: per-channel batch stats over (N, H, W).
    # TODO(synk): emit per-tile sum / sum-of-squares side outputs from the
    # matmul epilogue so these two reduction passes don't re-read the
    # activation from HBM.
    mean = jnp.mean(x, axis=(0, 1, 2))
    var = jnp.mean((x - mean) ** 2, axis=(0, 1, 2))
    return (x - mean) * jax.lax.rsqrt(var + eps) * gamma + beta


# ----------------------------------------------------------------------------
# Blocks (branch convs fused into one matmul: shared im2col, weights cat on N)
# ----------------------------------------------------------------------------
def resblock_fwd(p, x, stride, pad):
    cout = p['conv1']['w'].shape[0]
    w_cat = jnp.concatenate([p['conv1']['w'], p['add_conv']['w']], axis=0)
    b_cat = jnp.concatenate([p['conv1']['b'], p['add_conv']['b']], axis=0)
    both = conv2d(x, w_cat, b_cat, stride, pad)
    out = batchnorm_train(both[..., :cout], p['bn1']['g'], p['bn1']['beta'])
    add = batchnorm_train(both[..., cout:], p['add_bn']['g'], p['add_bn']['beta'])
    out = leaky_relu(out)
    out = batchnorm_train(conv2d(out, p['conv2']['w'], p['conv2']['b'], 1, 1),
                          p['bn2']['g'], p['bn2']['beta'])
    out = out + add
    return leaky_relu(out)


def upresblock_fwd(p, x, stride, pad):
    cout = p['conv1']['w'].shape[1]
    w_cat = jnp.concatenate([p['conv1']['w'], p['add_conv']['w']], axis=1)
    b_cat = jnp.concatenate([p['conv1']['b'], p['add_conv']['b']], axis=0)
    both = conv_transpose2d(x, w_cat, b_cat, stride, pad)
    out = batchnorm_train(both[..., :cout], p['bn1']['g'], p['bn1']['beta'])
    add = batchnorm_train(both[..., cout:], p['add_bn']['g'], p['add_bn']['beta'])
    out = leaky_relu(out)
    out = batchnorm_train(
        conv_transpose2d(out, p['conv2']['w'], p['conv2']['b'], 1, 1),
        p['bn2']['g'], p['bn2']['beta'])
    out = out + add
    return leaky_relu(out)


# ----------------------------------------------------------------------------
# Encoder / Decoder / VAE forward
# ----------------------------------------------------------------------------
def encoder_fwd(p, x, y):
    B = x.shape[0]
    out = resblock_fwd(p['conv1'], x, 2, 1)
    out = resblock_fwd(p['conv2'], out, 2, 1)
    out = leaky_relu(batchnorm_train(
        conv2d(out, p['conv3']['w'], p['conv3']['b'], 2, 1),
        p['bn3']['g'], p['bn3']['beta']))
    out = leaky_relu(batchnorm_train(
        conv2d(out, p['conv4']['w'], p['conv4']['b'], 2, 1),
        p['bn4']['g'], p['bn4']['beta']))
    out = leaky_relu(batchnorm_train(
        conv2d(out, p['conv5']['w'], p['conv5']['b'], 2, 1),
        p['bn5']['g'], p['bn5']['beta']))
    # flatten in PyTorch (NCHW) order
    flat = jnp.transpose(out, (0, 3, 1, 2)).reshape(B, -1)
    flat = jnp.concatenate([flat, y], axis=1)
    h = matmul_bias(flat, p['linear1']['w'], p['linear1']['b'], act="leaky_relu")
    # linear2_mu + linear2_logvar fused into a single matmul (shared A stream)
    latent = p['linear2_mu']['w'].shape[1]
    w_ml = jnp.concatenate([p['linear2_mu']['w'], p['linear2_logvar']['w']], axis=1)
    b_ml = jnp.concatenate([p['linear2_mu']['b'], p['linear2_logvar']['b']], axis=0)
    ml = matmul_bias(h, w_ml, b_ml)
    return ml[:, :latent], ml[:, latent:]


def decoder_fwd(p, z, y):
    B = z.shape[0]
    zy = jnp.concatenate([z, y], axis=1)
    out = matmul_bias(zy, p['linear1']['w'], p['linear1']['b'], act="leaky_relu")
    out = matmul_bias(out, p['linear2']['w'], p['linear2']['b'], act="leaky_relu")
    # unflatten matches PyTorch (B, 512, 4, 4) NCHW, then move to NHWC
    out = jnp.transpose(out.reshape(B, 512, 4, 4), (0, 2, 3, 1))
    out = upresblock_fwd(p['t_conv1'], out, 2, 1)
    out = upresblock_fwd(p['t_conv2'], out, 2, 1)
    out = leaky_relu(batchnorm_train(
        conv_transpose2d(out, p['t_conv3']['w'], p['t_conv3']['b'], 2, 1),
        p['bn3']['g'], p['bn3']['beta']))
    out = leaky_relu(batchnorm_train(
        conv_transpose2d(out, p['t_conv4']['w'], p['t_conv4']['b'], 2, 1),
        p['bn4']['g'], p['bn4']['beta']))
    # final sigmoid fused into the matmul epilogue (no second elementwise pass)
    rec = conv_transpose2d(out, p['t_conv5']['w'], p['t_conv5']['b'], 2, 1,
                           act="sigmoid")
    return rec


@jax.jit
def vae_apply(params, x_nchw, y, eps_key):
    x = jnp.transpose(x_nchw, (0, 2, 3, 1))  # NCHW -> NHWC (internal layout)
    mu, logvar = encoder_fwd(params['enc'], x, y)
    std = jnp.exp(0.5 * logvar)
    eps = jax.random.uniform(eps_key, std.shape, std.dtype)  # torch.rand_like
    z = mu + std * eps
    rec_nhwc = decoder_fwd(params['dec'], z, y)
    rec = jnp.transpose(rec_nhwc, (0, 3, 1, 2))  # back to NCHW like PyTorch
    return rec, mu, logvar


# ----------------------------------------------------------------------------
# Deterministic parameter construction (PyTorch-default-like uniform init)
# ----------------------------------------------------------------------------
def build_params(seed=42):
    keys = iter(jax.random.split(jax.random.PRNGKey(seed), 256))
    nk = lambda: next(keys)

    def conv(cout, cin, k):
        bound = 1.0 / math.sqrt(cin * k * k)
        return {'w': jax.random.uniform(nk(), (cout, cin, k, k), jnp.float32,
                                        -bound, bound),
                'b': jax.random.uniform(nk(), (cout,), jnp.float32,
                                        -bound, bound)}

    def convT(cin, cout, k):
        bound = 1.0 / math.sqrt(cin * k * k)
        return {'w': jax.random.uniform(nk(), (cin, cout, k, k), jnp.float32,
                                        -bound, bound),
                'b': jax.random.uniform(nk(), (cout,), jnp.float32,
                                        -bound, bound)}

    def linear(fin, fout):
        bound = 1.0 / math.sqrt(fin)
        return {'w': jax.random.uniform(nk(), (fin, fout), jnp.float32,
                                        -bound, bound),
                'b': jax.random.uniform(nk(), (fout,), jnp.float32,
                                        -bound, bound)}

    def bn(c):
        return {'g': jnp.ones((c,), jnp.float32),
                'beta': jnp.zeros((c,), jnp.float32)}

    def resblock(cin, cout, k):
        return {'conv1': conv(cout, cin, k), 'bn1': bn(cout),
                'conv2': conv(cout, cout, 3), 'bn2': bn(cout),
                'add_conv': conv(cout, cin, k), 'add_bn': bn(cout)}

    def upresblock(cin, cout, k):
        return {'conv1': convT(cin, cout, k), 'bn1': bn(cout),
                'conv2': convT(cout, cout, 3), 'bn2': bn(cout),
                'add_conv': convT(cin, cout, k), 'add_bn': bn(cout)}

    enc = {
        'conv1': resblock(3, 32, 4),
        'conv2': resblock(32, 64, 4),
        'conv3': conv(128, 64, 4), 'bn3': bn(128),
        'conv4': conv(256, 128, 4), 'bn4': bn(256),
        'conv5': conv(512, 256, 4), 'bn5': bn(512),
        'linear1': linear(512 * 4 * 4 + 40, 1024),
        'linear2_mu': linear(1024, 512),
        'linear2_logvar': linear(1024, 512),
    }
    dec = {
        'linear1': linear(512 + 40, 1024),
        'linear2': linear(1024, 512 * 4 * 4),
        't_conv1': upresblock(512, 256, 4),
        't_conv2': upresblock(256, 128, 4),
        't_conv3': convT(128, 64, 4), 'bn3': bn(64),
        't_conv4': convT(64, 32, 4), 'bn4': bn(32),
        't_conv5': convT(32, 3, 4),
    }
    return {'enc': enc, 'dec': dec}


# ----------------------------------------------------------------------------
# Small numerical sanity check: phase-decomposed ConvTranspose vs a plain-JAX
# zero-dilation reference (f32).  Loose tolerance because the Pallas path uses
# bf16 operands.
# ----------------------------------------------------------------------------
def _ref_conv_transpose_s2_k4_p1(x, w, b):
    Cin, Cout, kh, kw = w.shape
    B, H, W, C = x.shape
    xd = jnp.zeros((B, 2 * H - 1, 2 * W - 1, C), jnp.float32)
    xd = xd.at[:, ::2, ::2, :].set(x)
    w_conv = jnp.transpose(w[:, :, ::-1, ::-1], (1, 0, 2, 3))   # (Cout,Cin,kh,kw)
    xpp = jnp.pad(xd, ((0, 0), (2, 2), (2, 2), (0, 0)))
    Ho, Wo = 2 * H, 2 * W
    out = jnp.zeros((B, Ho, Wo, Cout), jnp.float32)
    for i in range(kh):
        for j in range(kw):
            out = out + jnp.einsum('bhwc,oc->bhwo',
                                   xpp[:, i:i + Ho, j:j + Wo, :],
                                   w_conv[:, :, i, j])
    return out + b


# ----------------------------------------------------------------------------
if __name__ == "__main__":
    # sanity-check the transpose-conv phase decomposition on a tiny case
    kc1, kc2 = jax.random.split(jax.random.PRNGKey(7))
    xs = jax.random.uniform(kc1, (1, 4, 4, 8), jnp.float32, -1.0, 1.0)
    ws = jax.random.uniform(kc2, (8, 4, 4, 4), jnp.float32, -0.5, 0.5)
    bs = jnp.linspace(-0.1, 0.1, 4).astype(jnp.float32)
    got = _conv_transpose_s2_k4_p1(xs, ws, bs)
    ref = _ref_conv_transpose_s2_k4_p1(xs, ws, bs)
    assert got.shape == ref.shape
    assert bool(jnp.allclose(got, ref, atol=0.15, rtol=0.05)), "phase ConvT mismatch"

    root = jax.random.PRNGKey(0)
    kx, ky, keps = jax.random.split(root, 3)
    # Encoder structure requires 128x128 spatial input (flatten -> 512*4*4).
    x = jax.random.uniform(kx, (2, 3, 128, 128), jnp.float32)   # NCHW like PyTorch
    y = jax.random.uniform(ky, (2, 40), jnp.float32)            # cond vector
    params = build_params()

    rec, mu, logvar = vae_apply(params, x, y, keps)
    jax.block_until_ready((rec, mu, logvar))

    assert rec.shape == (2, 3, 128, 128)
    assert mu.shape == (2, 512) and logvar.shape == (2, 512)
    assert bool(jnp.all(jnp.isfinite(rec)))
    assert bool(jnp.all((rec >= 0.0) & (rec <= 1.0)))
    print("KERNEL_OK")
</pallas_src>

<mosaic_0001>
module attributes {stable_mosaic.version = 11 : i64} {
  func.func @_matmul_kernel(%arg0: i32, %arg1: i32, %arg2: i32, %arg3: memref<16x128xbf16, #tpu.memory_space<vmem>>, %arg4: memref<128x128xbf16, #tpu.memory_space<vmem>>, %arg5: memref<1x128xf32, #tpu.memory_space<vmem>>, %arg6: memref<16x128xf32, #tpu.memory_space<vmem>>, %arg7: memref<16x128xf32, #tpu.memory_space<vmem>>) attributes {dimension_semantics = [#tpu.dimension_semantics<parallel>, #tpu.dimension_semantics<parallel>, #tpu.dimension_semantics<arbitrary>], iteration_bounds = array<i64: 1, 1, 1>, scalar_prefetch = 0 : i64, scratch_operands = 1 : i64, tpu.core_type = #tpu.core_type<tc>, window_params = [{transform_indices = @transform_0, window_bounds = array<i64: 16, 128>}, {transform_indices = @transform_1, window_bounds = array<i64: 128, 128>}, {transform_indices = @transform_2, window_bounds = array<i64: 1, 128>}, {transform_indices = @transform_3, window_bounds = array<i64: 16, 128>}]} {
    %c0_i32 = arith.constant 0 : i32
    %0 = arith.cmpi eq, %arg2, %c0_i32 : i32
    %1 = arith.extui %0 : i1 to i32
    %c0_i32_0 = arith.constant 0 : i32
    %2 = arith.cmpi ne, %1, %c0_i32_0 : i32
    scf.if %2 {
      %cst_10 = arith.constant 0.000000e+00 : f32
      %12 = vector.broadcast %cst_10 : f32 to vector<16x128xf32>
      %c0_11 = arith.constant 0 : index
      %c0_12 = arith.constant 0 : index
      %13 = vector.load %arg7[%c0_11, %c0_12] : memref<16x128xf32, #tpu.memory_space<vmem>>, vector<16x128xf32>
      tpu.vector_store %arg7[%c0_11, %c0_12], %12 {strides = array<i32>} : memref<16x128xf32, #tpu.memory_space<vmem>>, vector<16x128xf32>,
    } else {
    }
    %c0 = arith.constant 0 : index
    %c0_1 = arith.constant 0 : index
    %3 = vector.load %arg7[%c0, %c0_1] : memref<16x128xf32, #tpu.memory_space<vmem>>, vector<16x128xf32>
    %c0_2 = arith.constant 0 : index
    %c0_3 = arith.constant 0 : index
    %4 = vector.load %arg3[%c0_2, %c0_3] : memref<16x128xbf16, #tpu.memory_space<vmem>>, vector<16x128xbf16>
    %c0_4 = arith.constant 0 : index
    %c0_5 = arith.constant 0 : index
    %5 = vector.load %arg4[%c0_4, %c0_5] : memref<128x128xbf16, #tpu.memory_space<vmem>>, vector<128x128xbf16>
    %cst = arith.constant dense<0.000000e+00> : vector<16x128xf32>
    %6 = tpu.matmul %4, %5, %cst {dimension_numbers = #tpu.dot_dimension_numbers<[1], [0], [0], [1], [0, 0, 1, 1], [], []>} : vector<16x128xbf16>, vector<128x128xbf16>, vector<16x128xf32> -> vector<16x128xf32>
    %7 = arith.addf %3, %6 : vector<16x128xf32>
    %c0_6 = arith.constant 0 : index
    %c0_7 = arith.constant 0 : index
    %8 = vector.load %arg7[%c0_6, %c0_7] : memref<16x128xf32, #tpu.memory_space<vmem>>, vector<16x128xf32>
    tpu.vector_store %arg7[%c0_6, %c0_7], %7 {strides = array<i32>} : memref<16x128xf32, #tpu.memory_space<vmem>>, vector<16x128xf32>,
    %c0_i32_8 = arith.constant 0 : i32
    %9 = arith.cmpi eq, %arg2, %c0_i32_8 : i32
    %10 = arith.extui %9 : i1 to i32
    %c0_i32_9 = arith.constant 0 : i32
    %11 = arith.cmpi ne, %10, %c0_i32_9 : i32
    scf.if %11 {
      %c0_10 = arith.constant 0 : index
      %c0_11 = arith.constant 0 : index
      %12 = vector.load %arg7[%c0_10, %c0_11] : memref<16x128xf32, #tpu.memory_space<vmem>>, vector<16x128xf32>
      %c0_12 = arith.constant 0 : index
      %c0_13 = arith.constant 0 : index
      %13 = vector.load %arg5[%c0_12, %c0_13] : memref<1x128xf32, #tpu.memory_space<vmem>>, vector<1x128xf32>
      %14 = vector.broadcast %13 : vector<1x128xf32> to vector<16x128xf32>
      %15 = arith.addf %12, %14 : vector<16x128xf32>
      %c0_14 = arith.constant 0 : index
      %c0_15 = arith.constant 0 : index
      %16 = vector.load %arg6[%c0_14, %c0_15] : memref<16x128xf32, #tpu.memory_space<vmem>>, vector<16x128xf32>
      tpu.vector_store %arg6[%c0_14, %c0_15], %15 {strides = array<i32>} : memref<16x128xf32, #tpu.memory_space<vmem>>, vector<16x128xf32>,
    } else {
    }
    return
  }
  func.func @transform_0(%arg0: i32, %arg1: i32, %arg2: i32) -> (i32, i32) {
    %c0_i32 = arith.constant 0 : i32
    return %arg0, %arg2 : i32, i32
  }
  func.func @transform_1(%arg0: i32, %arg1: i32, %arg2: i32) -> (i32, i32) {
    %c0_i32 = arith.constant 0 : i32
    return %arg2, %arg1 : i32, i32
  }
  func.func @transform_2(%arg0: i32, %arg1: i32, %arg2: i32) -> (i32, i32) {
    %c0_i32 = arith.constant 0 : i32
    %c0_i32_0 = arith.constant 0 : i32
    return %c0_i32, %arg1 : i32, i32
  }
  func.func @transform_3(%arg0: i32, %arg1: i32, %arg2: i32) -> (i32, i32) {
    %c0_i32 = arith.constant 0 : i32
    return %arg0, %arg1 : i32, i32
  }
}

</mosaic_0001>

<llo_original>
// kernel: tpu_custom_call.1
$region0: #{tpu_custom_call.1}
  #allocation0 [shape = 'u32[]', space=smem, size = 0x4, offset = 0x4, fixed_abs, tag = 'smem constant byte address 0x4 - core index']
  #allocation1 [shape = 'u32[144,128]{1,0:T(1,128)}', space=vmem, size = 0x12000, scoped, tag = 'internal scratch']
  #allocation2 [shape = 'f32[16,128]{1,0:T(8,128)}', space=vmem, size = 0x2000, scoped, tag = 'scratch operand']
  %s0 = inlined_call_operand.hbm [shape: bf16[16,128], index: 0, kind: input, shape index: {}]
  %s1 = inlined_call_operand.hbm [shape: bf16[128,128], index: 1, kind: input, shape index: {}]
  %s2 = inlined_call_operand.vmem [shape: f32[1,128], index: 2, kind: input, shape index: {}]
  %s3 = inlined_call_operand.hbm [shape: f32[16,128], index: 3, kind: output, shape index: {}]
  %s4 = sld [smem:[#allocation0]]
  $region38: #{tpu_custom_call.1} parent=0
    _
  %s6 = ssub.s32 1, %s4
  %s7 = scalar_select 0, %s6, %s4
  $region1: #{tpu_custom_call.1} parent=0
    #allocation3 [shape = 'u8[4096]{0}', space=vmem, size = 0x1000, scoped, tag = 'input window, operand 0, single buffered']
    #allocation4 [shape = 's32[1]{0}', space=sflag, size = 0x4, scoped, tag = 'scoped memory for tpu_custom_call.1']
    #allocation5 [shape = 's32[1]{0}', space=sflag, size = 0x4, scoped, tag = 'scoped memory for tpu_custom_call.1']
    #allocation6 [shape = 'u8[32768]{0}', space=vmem, size = 0x8000, scoped, tag = 'input window, operand 1, single buffered']
    #allocation7 [shape = 's32[1]{0}', space=sflag, size = 0x4, scoped, tag = 'scoped memory for tpu_custom_call.1']
    #allocation8 [shape = 'u8[8192]{0}', space=vmem, size = 0x2000, scoped, tag = 'output window, operand 0, single buffered']
    %8 = vsyncpa [#allocation4], 0
    %9 = vsyncpa [#allocation7], 0
    %10 = vsyncpa [#allocation5], 0
    // Predicated region
    $region2: #{tpu_custom_call.1} parent=1 // pred_check
      _
    $region3: #{tpu_custom_call.1} parent=1 // pred_check_branch
      %12 = sbr.rel (0) target = $region5
    $region4: #{tpu_custom_call.1} parent=1 // pred_region
      %s14 = ssub.s32 128, 128
      %15 = vsyncadd [#allocation4], %s14
      %s16 = sshll.u32 [#allocation3], 4
      %s17 = int_to_ptr.vmem [resolvable:$true] %s16
      %22 = dma.hbm_to_vmem [thread:$0]  %s0, 128, %s17, [#allocation4], 64, 64, 4
    $region5: #{tpu_custom_call.1} parent=1 // pred_fallthru
      _
    // Predicated region
    $region6: #{tpu_custom_call.1} parent=1 // pred_check
      _
    $region7: #{tpu_custom_call.1} parent=1 // pred_check_branch
      %24 = sbr.rel (0) target = $region9
    $region8: #{tpu_custom_call.1} parent=1 // pred_region
      %s26 = ssub.s32 1024, 1024
      %27 = vsyncadd [#allocation7], %s26
      %s28 = sshll.u32 [#allocation6], 4
      %s29 = int_to_ptr.vmem [resolvable:$true] %s28
      %34 = dma.hbm_to_vmem [thread:$0]  %s1, 1024, %s29, [#allocation7], 64, 64, 4
    $region9: #{tpu_custom_call.1} parent=1 // pred_fallthru
      _
    // Predicated region
    $region10: #{tpu_custom_call.1} parent=1 // pred_check
      _
    $region11: #{tpu_custom_call.1} parent=1 // pred_check_branch
      %36 = sbr.rel (0) target = $region13
    $region12: #{tpu_custom_call.1} parent=1 // pred_region
      _
    $region13: #{tpu_custom_call.1} parent=1 // pred_fallthru
      _
    // Predicated region
    $region14: #{tpu_custom_call.1} parent=1 // pred_check
      _
    $region15: #{tpu_custom_call.1} parent=1 // pred_check_branch
      %38 = sbr.rel (0) target = $region17
    $region16: #{tpu_custom_call.1} parent=1 // pred_region
      %39 = dma.done [#allocation4], 128
    $region17: #{tpu_custom_call.1} parent=1 // pred_fallthru
      _
    // Predicated region
    $region18: #{tpu_custom_call.1} parent=1 // pred_check
      _
    $region19: #{tpu_custom_call.1} parent=1 // pred_check_branch
      %41 = sbr.rel (0) target = $region21
    $region20: #{tpu_custom_call.1} parent=1 // pred_region
      %42 = dma.done [#allocation7], 1024
    $region21: #{tpu_custom_call.1} parent=1 // pred_fallthru
      _
    %p44 = scmp.eq.s32.totalorder 0, 0
    // Predicated region
    $region22: #{tpu_custom_call.1} parent=1 // pred_check
      %p45 = pneg %p44
    $region23: #{tpu_custom_call.1} parent=1 // pred_check_branch
      %47 = sbr.rel (%p45) target = $region25
    $region24: #{tpu_custom_call.1} parent=1 // pred_region
      %48 = vst [vmem:[#allocation2] sm:$0xff] 0.0
      %49 = vst [vmem:[#allocation2 + $0x8] sm:$0xff] 0.0
    $region25: #{tpu_custom_call.1} parent=1 // pred_fallthru
      _
    %v50 = vld [vmem:[#allocation2] sm:$0xff]
    %v51 = vld [vmem:[#allocation2 + $0x8] sm:$0xff]
    %v52 = vld [vmem:[#allocation3] sm:$0xf]
    %v53 = vld [vmem:[#allocation3 + $0x4] sm:$0xf]
    %v54 = vld [vmem:[#allocation6] sm:$0xf]
    %v55 = vld [vmem:[#allocation6 + $0x4] sm:$0xf]
    %v56 = vld [vmem:[#allocation6 + $0x8] sm:$0xf]
    %v57 = vld [vmem:[#allocation6 + $0xc] sm:$0xf]
    %v58 = vld [vmem:[#allocation6 + $0x10] sm:$0xf]
    %v59 = vld [vmem:[#allocation6 + $0x14] sm:$0xf]
    %v60 = vld [vmem:[#allocation6 + $0x18] sm:$0xf]
    %v61 = vld [vmem:[#allocation6 + $0x1c] sm:$0xf]
    %v62 = vld [vmem:[#allocation6 + $0x20] sm:$0xf]
    %v63 = vld [vmem:[#allocation6 + $0x24] sm:$0xf]
    %v64 = vld [vmem:[#allocation6 + $0x28] sm:$0xf]
    %v65 = vld [vmem:[#allocation6 + $0x2c] sm:$0xf]
    %v66 = vld [vmem:[#allocation6 + $0x30] sm:$0xf]
    %v67 = vld [vmem:[#allocation6 + $0x34] sm:$0xf]
    %v68 = vld [vmem:[#allocation6 + $0x38] sm:$0xf]
    %v69 = vld [vmem:[#allocation6 + $0x3c] sm:$0xf]
    %v72 = vunpack.c.l.b16 %v52
    %v73 = vunpack.c.l.b16 %v53
    %v74 = vpack.c.b16 %v73, %v72
    %v92 = vunpack.c.l.b16 %v54
    %v93 = vunpack.c.l.b16 %v55
    %v94 = vunpack.c.l.b16 %v56
    %v95 = vunpack.c.l.b16 %v57
    %v96 = vunpack.c.l.b16 %v58
    %v97 = vunpack.c.l.b16 %v59
    %v98 = vunpack.c.l.b16 %v60
    %v99 = vunpack.c.l.b16 %v61
    %v100 = vunpack.c.l.b16 %v62
    %v101 = vunpack.c.l.b16 %v63
    %v102 = vunpack.c.l.b16 %v64
    %v103 = vunpack.c.l.b16 %v65
    %v104 = vunpack.c.l.b16 %v66
    %v105 = vunpack.c.l.b16 %v67
    %v106 = vunpack.c.l.b16 %v68
    %v107 = vunpack.c.l.b16 %v69
    %v108 = vpack.c.b16 %v93, %v92
    %v109 = vpack.c.b16 %v95, %v94
    %v110 = vpack.c.b16 %v97, %v96
    %v111 = vpack.c.b16 %v99, %v98
    %v112 = vpack.c.b16 %v101, %v100
    %v113 = vpack.c.b16 %v103, %v102
    %v114 = vpack.c.b16 %v105, %v104
    %v115 = vpack.c.b16 %v107, %v106
    %124 = vmatprep.subr.bf16.mxu0 0
    %125 = vmatpush1.bf16.msra.mxu0 %v108
    %126 = vmatprep.subr.bf16.mxu0 0
    %127 = vmatpush1.bf16.msra.mxu0 %v109
    %128 = vmatprep.subr.bf16.mxu0 0
    %129 = vmatpush1.bf16.msra.mxu0 %v110
    %130 = vmatprep.subr.bf16.mxu0 0
    %131 = vmatpush1.bf16.msra.mxu0 %v111
    %132 = vmatprep.subr.bf16.mxu0 0
    %133 = vmatpush1.bf16.msra.mxu0 %v112
    %134 = vmatprep.subr.bf16.mxu0 0
    %135 = vmatpush1.bf16.msra.mxu0 %v113
    %136 = vmatprep.subr.bf16.mxu0 0
    %137 = vmatpush1.bf16.msra.mxu0 %v114
    %138 = vmatprep.subr.bf16.mxu0 0
    %139 = vmatpush1.bf16.msra.mxu0 %v115
    %140 = vmatprep.subr.bf16.mxu0 0
    %141 = vmatpush1.bf16.msra.mxu0 0
    %142 = vmatprep.subr.bf16.mxu0 0
    %143 = vmatpush1.bf16.msra.mxu0 0
    %144 = vmatprep.subr.bf16.mxu0 0
    %145 = vmatpush1.bf16.msra.mxu0 0
    %146 = vmatprep.subr.bf16.mxu0 0
    %147 = vmatpush1.bf16.msra.mxu0 0
    %148 = vmatprep.subr.bf16.mxu0 0
    %149 = vmatpush1.bf16.msra.mxu0 0
    %150 = vmatprep.subr.bf16.mxu0 0
    %151 = vmatpush1.bf16.msra.mxu0 0
    %152 = vmatprep.subr.bf16.mxu0 0
    %153 = vmatpush1.bf16.msra.mxu0 0
    %154 = vmatprep.subr.bf16.mxu0 0
    %155 = vmatpush1.bf16.msra.mxu0 0
    %156 = vmatprep.mubr.bf16.mxu0 0
    %157 = vmatmul.mubr.bf16.gmra.mrb[0].mxu0 %v74
    %v158 = vpop.f32.mrb[0].mxu0
    %v159 = vadd.f32 0.0, %v158
    %v160 = vpop.f32.mrb[0].mxu0
    %v161 = vpop.f32.mrb[0].mxu0
    %v162 = vadd.f32 0.0, %v161
    %v163 = vpop.f32.mrb[0].mxu0
    %164 = vdwg.mxu0
    %v165 = vadd.f32 %v50, %v159
    %v166 = vadd.f32 %v51, %v162
    %167 = vst [vmem:[#allocation2] sm:$0xff] %v165
    %168 = vst [vmem:[#allocation2 + $0x8] sm:$0xff] %v166
    // Predicated region
    $region26: #{tpu_custom_call.1} parent=1 // pred_check
      %p169 = pneg %p44
    $region27: #{tpu_custom_call.1} parent=1 // pred_check_branch
      %171 = sbr.rel (%p169) target = $region29
    $region28: #{tpu_custom_call.1} parent=1 // pred_region
      %v172 = vld [vmem:[#allocation2] sm:$0xff]
      %v173 = vld [vmem:[#allocation2 + $0x8] sm:$0xff]
      %v174 = vld [vmem:[%s2] sm:$0x1]
      %v176 = vlaneseq
      %v177 = vshrl.u32 %v176, 7
      %v178 = vsub.s32 0, %v177
      %v179 = vrot.slane %v174, %v178
      %v181 = vadd.f32 %v172, %v179
      %v182 = vadd.f32 %v173, %v179
      %183 = vst [vmem:[#allocation8] sm:$0xff] %v181
      %184 = vst [vmem:[#allocation8 + $0x8] sm:$0xff] %v182
    $region29: #{tpu_custom_call.1} parent=1 // pred_fallthru
      _
    // Predicated region
    $region30: #{tpu_custom_call.1} parent=1 // pred_check
      _
    $region31: #{tpu_custom_call.1} parent=1 // pred_check_branch
      %186 = sbr.rel (0) target = $region33
    $region32: #{tpu_custom_call.1} parent=1 // pred_region
      %s188 = ssub.s32 256, 256
      %189 = vsyncadd [#allocation5], %s188
      %s190 = sshll.u32 [#allocation8], 4
      %s191 = int_to_ptr.vmem [resolvable:$true] %s190
      %196 = dma.vmem_to_hbm [thread:$0]  %s191, 256, %s3, [#allocation5], 128, 128, 8
    $region33: #{tpu_custom_call.1} parent=1 // pred_fallthru
      _
    // Predicated region
    $region34: #{tpu_custom_call.1} parent=1 // pred_check
      _
    $region35: #{tpu_custom_call.1} parent=1 // pred_check_branch
      %198 = sbr.rel (0) target = $region37
    $region36: #{tpu_custom_call.1} parent=1 // pred_region
      %199 = dma.done [#allocation5], 256
    $region37: #{tpu_custom_call.1} parent=1 // pred_fallthru
      _
    %200 = vsyncpa [#allocation4], 1
    %201 = vsyncpa [#allocation7], 1
    %202 = vsyncpa [#allocation5], 1

</llo_original>
